<compile_context>
chip_gen: v7x
topology: tpu7x:2x2x1
jax: 0.10.0
libtpu: 0.0.40
codegen_flags: <defaults>
</compile_context>

<pallas_src>
import functools
import math

import jax
import jax.numpy as jnp
from jax import lax
from jax.experimental import pallas as pl
from jax.experimental.pallas import tpu as pltpu


_F32_MIN = float(jnp.finfo(jnp.float32).min)

# Sublane granularity by itemsize (bf16 packs in pairs, int8 in quads).
_SUBLANE_ALIGN = {4: 8, 2: 16, 1: 32}


# ----------------------------------------------------------------------------
# Kernels
# ----------------------------------------------------------------------------
def _softmax_lane_kernel(x_ref, o_ref):
    """Softmax over the last (lane) axis of a (tile_rows, cols) block."""
    x = x_ref[...].astype(jnp.float32)
    m = jnp.max(x, axis=-1, keepdims=True)
    e = jnp.exp(x - m)
    s = jnp.sum(e, axis=-1, keepdims=True)
    o_ref[...] = (e * pl.reciprocal(s, approx=False)).astype(o_ref.dtype)


def _softmax_axis1_kernel(x_ref, o_ref):
    """Softmax over axis=1 of a 3-D (outer, C, inner) or 4-D (outer, C, sub, 128)
    block.  Lanes stay dense; for 4-D blocks the reduce over C is element-wise
    VPU work across vregs (no XLU sublane reduce, no C->8 sublane padding)."""
    x = x_ref[...].astype(jnp.float32)
    m = jnp.max(x, axis=1, keepdims=True)
    e = jnp.exp(x - m)
    s = jnp.sum(e, axis=1, keepdims=True)
    o_ref[...] = (e * pl.reciprocal(s, approx=False)).astype(o_ref.dtype)


def _softmax_stats_kernel(x_ref, m_ref, l_ref, m_sc, l_sc, *, cols):
    """Online (running max / running sum-of-exp) pass over column blocks."""
    j = pl.program_id(1)

    @pl.when(j == 0)
    def _():
        m_sc[...] = jnp.full(m_sc.shape, _F32_MIN, jnp.float32)
        l_sc[...] = jnp.zeros(l_sc.shape, jnp.float32)

    x = x_ref[...].astype(jnp.float32)
    tile_cols = x.shape[-1]
    col_ids = j * tile_cols + lax.broadcasted_iota(jnp.int32, x.shape, 1)
    x = jnp.where(col_ids < cols, x, -jnp.inf)  # mask the ragged last col block

    m_prev = m_sc[...]
    m_new = jnp.maximum(m_prev, jnp.max(x, axis=-1, keepdims=True))
    l_sc[...] = l_sc[...] * jnp.exp(m_prev - m_new) + jnp.sum(
        jnp.exp(x - m_new), axis=-1, keepdims=True)
    m_sc[...] = m_new

    @pl.when(j == pl.num_programs(1) - 1)
    def _():
        m_ref[...] = m_sc[...]
        l_ref[...] = l_sc[...]


def _softmax_norm_kernel(x_ref, m_ref, l_ref, o_ref):
    """Finalize: exp(x - m) * (1 / l), per-row stats broadcast over columns."""
    e = jnp.exp(x_ref[...].astype(jnp.float32) - m_ref[...])
    o_ref[...] = (e * pl.reciprocal(l_ref[...], approx=False)).astype(o_ref.dtype)


# ----------------------------------------------------------------------------
# Tiling helpers (VMEM-budget driven, cdiv grids)
# ----------------------------------------------------------------------------
def _cdiv(a, b):
    return -(-a // b)


def _round_up(a, b):
    return _cdiv(a, b) * b


def _vmem_capacity_bytes():
    try:
        cap = getattr(pltpu.get_tpu_info(), "vmem_capacity_bytes", None)
        if cap:
            return int(cap)
    except Exception:
        pass
    try:
        kind = jax.devices()[0].device_kind.lower()
    except Exception:
        kind = ""
    # Only v7x has 64 MiB/TC; v5e/v6e (and older) have 128 MiB.
    return 64 * 1024 * 1024 if "v7" in kind else 128 * 1024 * 1024


def _budgets():
    """(per-block byte target, vmem_limit_bytes) for this TPU generation."""
    cap = _vmem_capacity_bytes()
    # Target ~4-16 MiB of in+out(+f32 temp) bytes per grid step so the ~0.35us
    # fixed per-step cost stays small even against v7x's 3.2 TB/s HBM.
    tile_budget = min(max(cap // 4, 4 * 1024 * 1024), 16 * 1024 * 1024)
    # Headroom for double buffering + compiler temporaries (48 MiB on v7x).
    vmem_limit = int(min(cap * 3 // 4, 100 * 1024 * 1024))
    return tile_budget, vmem_limit


def _bytes_per_block_elem(itemsize):
    # in + out, each double-buffered, in the I/O dtype, plus ~3 f32 temporaries.
    return 4 * itemsize + 3 * 4


def _pick_tile(extent, per_unit_bytes, budget_bytes, align, min_grid=1):
    """Tile for a cdiv-tiled axis: largest multiple of `align` whose block fits
    `budget_bytes`, shrunk so the grid has >= min_grid steps (when the extent
    allows) and nudged to an even grid (both v7x TensorCores get equal work)."""
    if extent <= align:
        return extent
    tile = max(align, (budget_bytes // (per_unit_bytes * align)) * align)
    if min_grid > 1:
        tile = min(tile, _round_up(_cdiv(extent, min_grid), align))
    if tile >= extent:
        return extent
    grid = _cdiv(extent, tile)
    if grid % 2 == 1:
        alt = _round_up(_cdiv(extent, grid + 1), align)
        if alt >= align and _cdiv(extent, alt) % 2 == 0:
            tile = alt
    return tile


# ----------------------------------------------------------------------------
# pallas_call wrappers
# ----------------------------------------------------------------------------
def _softmax_last_axis(x2d):
    """Row-wise softmax over the last axis of a 2-D array."""
    rows, cols = x2d.shape
    itemsize = jnp.dtype(x2d.dtype).itemsize
    per_elem = _bytes_per_block_elem(itemsize)
    row_align = _SUBLANE_ALIGN.get(itemsize, 8)
    tile_budget, vmem_limit = _budgets()

    if cols < 128:
        # Lane-dense stores: pad with -inf (exp(-inf)=0 keeps row sums exact).
        x_p = jnp.pad(x2d, ((0, 0), (0, 128 - cols)), constant_values=-jnp.inf)
        return _softmax_last_axis(x_p)[:, :cols]

    if row_align * cols * per_elem > tile_budget:
        # Even a minimal row block would blow the VMEM budget (e.g. 256K-vocab
        # f32 logits on v7x's 64 MiB VMEM): column-tiled online fallback.
        return _softmax_last_axis_wide(x2d)

    tile_rows = _pick_tile(rows, cols * per_elem, tile_budget, row_align,
                           min_grid=4)
    spec = pl.BlockSpec((tile_rows, cols), lambda i: (i, 0))
    return pl.pallas_call(
        _softmax_lane_kernel,
        out_shape=jax.ShapeDtypeStruct((rows, cols), x2d.dtype),
        grid=(_cdiv(rows, tile_rows),),
        in_specs=[spec],
        out_specs=spec,
        compiler_params=pltpu.CompilerParams(
            dimension_semantics=("parallel",), vmem_limit_bytes=vmem_limit),
    )(x2d)


def _softmax_last_axis_wide(x2d, tile_cols=None):
    """Two-pass (online stats + normalize) softmax for rows too wide to hold a
    full row block in VMEM.  ~1.5x the HBM traffic of the single-pass kernel,
    but never exceeds the per-block VMEM budget."""
    rows, cols = x2d.shape
    dtype = x2d.dtype
    itemsize = jnp.dtype(dtype).itemsize
    per_elem = _bytes_per_block_elem(itemsize)
    row_align = _SUBLANE_ALIGN.get(itemsize, 8)
    tile_budget, vmem_limit = _budgets()

    tile_rows = rows if rows <= 8 * row_align else 8 * row_align
    if tile_cols is None:
        tile_cols = _pick_tile(cols, tile_rows * per_elem, tile_budget, 128)
    row_grid = _cdiv(rows, tile_rows)
    col_grid = _cdiv(cols, tile_cols)

    x_spec = pl.BlockSpec((tile_rows, tile_cols), lambda i, j: (i, j))
    s_spec = pl.BlockSpec((tile_rows, 1), lambda i, j: (i, 0))

    m, l = pl.pallas_call(
        functools.partial(_softmax_stats_kernel, cols=cols),
        out_shape=(jax.ShapeDtypeStruct((rows, 1), jnp.float32),
                   jax.ShapeDtypeStruct((rows, 1), jnp.float32)),
        grid=(row_grid, col_grid),
        in_specs=[x_spec],
        out_specs=(s_spec, s_spec),
        scratch_shapes=[pltpu.VMEM((tile_rows, 1), jnp.float32),
                        pltpu.VMEM((tile_rows, 1), jnp.float32)],
        compiler_params=pltpu.CompilerParams(
            dimension_semantics=("parallel", "arbitrary"),
            vmem_limit_bytes=vmem_limit),
    )(x2d)

    return pl.pallas_call(
        _softmax_norm_kernel,
        out_shape=jax.ShapeDtypeStruct((rows, cols), dtype),
        grid=(row_grid, col_grid),
        in_specs=[x_spec, s_spec, s_spec],
        out_specs=x_spec,
        compiler_params=pltpu.CompilerParams(
            dimension_semantics=("parallel", "parallel"),
            vmem_limit_bytes=vmem_limit),
    )(x2d, m, l)


def _softmax_middle_axis(x3d):
    """Softmax over axis=1 of a contiguous (outer, C, inner) view (no transposes;
    the 128-lane last dim stays dense)."""
    outer, C, inner = x3d.shape
    dtype = x3d.dtype
    itemsize = jnp.dtype(dtype).itemsize
    per_elem = _bytes_per_block_elem(itemsize)
    sub_align = _SUBLANE_ALIGN.get(itemsize, 8)
    tile_budget, vmem_limit = _budgets()

    inner_p, x_in = inner, x3d
    if inner < 128:
        # Lane-dense loads/stores are the biggest measured lever for mem-bound
        # kernels; zero padding is safe because the reduction axis is C.
        inner_p = 128
        x_in = jnp.pad(x3d, ((0, 0), (0, 0), (0, inner_p - inner)))

    if inner_p % 128 == 0:
        # 4-D layout (outer, C, inner//128, 128): C sits on a non-minor axis, so
        # the reduce is element-wise across C vregs and there is no C->sublane
        # padding (a ~2x VMEM saving for C=4 f32 NCHW).
        sub = inner_p // 128
        x4 = x_in.reshape(outer, C, sub, 128)
        tile_sub = _pick_tile(sub, C * 128 * per_elem, tile_budget, sub_align)
        tile_outer = _pick_tile(outer, C * tile_sub * 128 * per_elem,
                                tile_budget, 1, min_grid=4)
        spec = pl.BlockSpec((tile_outer, C, tile_sub, 128),
                            lambda i, j: (i, 0, j, 0))
        y = pl.pallas_call(
            _softmax_axis1_kernel,
            out_shape=jax.ShapeDtypeStruct(x4.shape, dtype),
            grid=(_cdiv(outer, tile_outer), _cdiv(sub, tile_sub)),
            in_specs=[spec],
            out_specs=spec,
            compiler_params=pltpu.CompilerParams(
                dimension_semantics=("parallel", "parallel"),
                vmem_limit_bytes=vmem_limit),
        )(x4).reshape(outer, C, inner_p)
    else:
        # inner >= 128 but not a multiple of 128: cdiv-tile the lane axis in
        # 128-wide chunks; only the last block's stores are masked.
        # TODO(synk): a huge C here keeps the whole channel axis in every block
        # and can exceed the per-block budget (rare layout; still correct).
        tile_inner = _pick_tile(inner_p, C * per_elem, tile_budget, 128)
        tile_outer = _pick_tile(outer, C * tile_inner * per_elem,
                                tile_budget, 1, min_grid=4)
        spec = pl.BlockSpec((tile_outer, C, tile_inner), lambda i, j: (i, 0, j))
        y = pl.pallas_call(
            _softmax_axis1_kernel,
            out_shape=jax.ShapeDtypeStruct((outer, C, inner_p), dtype),
            grid=(_cdiv(outer, tile_outer), _cdiv(inner_p, tile_inner)),
            in_specs=[spec],
            out_specs=spec,
            compiler_params=pltpu.CompilerParams(
                dimension_semantics=("parallel", "parallel"),
                vmem_limit_bytes=vmem_limit),
        )(x_in)

    return y[:, :, :inner] if inner_p != inner else y


# ----------------------------------------------------------------------------
# Public entry point (QuantizedSoftmax.forward)
# ----------------------------------------------------------------------------
def _pytorch_softmax_dim(ndim):
    # Reproduces torch.nn.functional._get_softmax_dim for dim=None.
    return 0 if ndim in (0, 1, 3) else 1


def quantized_softmax(x, dim=None):
    """Forward pass of QuantizedSoftmax: softmax over `dim` (PyTorch rules)."""
    if dim is None:
        dim = _pytorch_softmax_dim(x.ndim)
    if x.ndim == 0:
        return jnp.ones_like(x)
    if x.size == 0:
        return x
    dim = dim % x.ndim
    shape = x.shape
    if dim == x.ndim - 1:
        rows = math.prod(shape[:-1])
        y = _softmax_last_axis(x.reshape(rows, shape[-1]))
    else:
        C = shape[dim]
        outer = math.prod(shape[:dim])
        inner = math.prod(shape[dim + 1:])
        y = _softmax_middle_axis(x.reshape(outer, C, inner))
    return y.reshape(shape)


if __name__ == "__main__":
    key = jax.random.PRNGKey(0)
    ks = jax.random.split(key, 6)

    # 1) NCHW, dim=None -> PyTorch picks dim=1 -> lane-dense 4-D channel path.
    x = jax.random.normal(ks[0], (2, 4, 16, 16), dtype=jnp.float32)
    out = quantized_softmax(x, dim=None)
    jax.block_until_ready(out)
    assert out.shape == x.shape and out.dtype == x.dtype
    assert jnp.allclose(out, jax.nn.softmax(x, axis=1), atol=1e-5)

    # 2) Last-axis (lane-reduction) path, already lane-dense.
    x2 = jax.random.normal(ks[1], (8, 128), dtype=jnp.float32)
    assert jnp.allclose(quantized_softmax(x2, dim=-1),
                        jax.nn.softmax(x2, axis=-1), atol=1e-5)

    # 3) Small-spatial NCHW (inner = 49 < 128): zero-padded lane-dense path.
    x3 = jax.random.normal(ks[2], (2, 4, 7, 7), dtype=jnp.float32)
    assert jnp.allclose(quantized_softmax(x3, dim=1),
                        jax.nn.softmax(x3, axis=1), atol=1e-5)

    # 4) Last axis narrower than a lane (cols = 50): -inf pad path.
    x4 = jax.random.normal(ks[3], (4, 50), dtype=jnp.float32)
    assert jnp.allclose(quantized_softmax(x4, dim=-1),
                        jax.nn.softmax(x4, axis=-1), atol=1e-5)

    # 5) Middle axis with inner = 196 (>=128, not a multiple of 128): 3-D path.
    x5 = jax.random.normal(ks[4], (2, 6, 14, 14), dtype=jnp.float32)
    assert jnp.allclose(quantized_softmax(x5, dim=1),
                        jax.nn.softmax(x5, axis=1), atol=1e-5)

    # 6) Column-tiled online-softmax fallback, exercised at a small shape by
    #    forcing tile_cols (the production trigger is vocab-sized last dims).
    x6 = jax.random.normal(ks[5], (16, 400), dtype=jnp.float32)
    out6 = _softmax_last_axis_wide(x6, tile_cols=128)
    jax.block_until_ready(out6)
    assert jnp.allclose(out6, jax.nn.softmax(x6, axis=-1), atol=1e-5)

    # 7) bf16 I/O (f32 accumulation in-kernel).
    xb = jax.random.normal(key, (2, 4, 16, 16), dtype=jnp.bfloat16)
    outb = quantized_softmax(xb, dim=1)
    jax.block_until_ready(outb)
    refb = jax.nn.softmax(xb.astype(jnp.float32), axis=1)
    assert outb.dtype == jnp.bfloat16
    assert jnp.allclose(outb.astype(jnp.float32), refb, atol=1e-2)

    print("KERNEL_OK")
</pallas_src>

<mosaic_0001>
module attributes {stable_mosaic.version = 11 : i64} {
  func.func @_softmax_axis1_kernel(%arg0: i32, %arg1: i32, %arg2: memref<1x4x2x128xf32, #tpu.memory_space<vmem>>, %arg3: memref<1x4x2x128xf32, #tpu.memory_space<vmem>>) attributes {dimension_semantics = [#tpu.dimension_semantics<parallel>, #tpu.dimension_semantics<parallel>], iteration_bounds = array<i64: 2, 1>, scalar_prefetch = 0 : i64, scratch_operands = 0 : i64, tpu.core_type = #tpu.core_type<tc>, window_params = [{transform_indices = @transform_0, window_bounds = array<i64: 1, 4, 2, 128>}, {transform_indices = @transform_1, window_bounds = array<i64: 1, 4, 2, 128>}]} {
    %c0 = arith.constant 0 : index
    %c0_0 = arith.constant 0 : index
    %c0_1 = arith.constant 0 : index
    %c0_2 = arith.constant 0 : index
    %0 = vector.load %arg2[%c0, %c0_0, %c0_1, %c0_2] : memref<1x4x2x128xf32, #tpu.memory_space<vmem>>, vector<1x4x2x128xf32>
    %cst = arith.constant dense<0xFF800000> : vector<1x2x128xf32>
    %1 = vector.multi_reduction <maximumf>, %0, %cst [1] : vector<1x4x2x128xf32> to vector<1x2x128xf32>
    %2 = vector.shape_cast %1 : vector<1x2x128xf32> to vector<1x1x2x128xf32>
    %3 = vector.broadcast %2 : vector<1x1x2x128xf32> to vector<1x4x2x128xf32>
    %4 = arith.subf %0, %3 : vector<1x4x2x128xf32>
    %5 = math.exp %4 : vector<1x4x2x128xf32>
    %cst_3 = arith.constant dense<0.000000e+00> : vector<1x2x128xf32>
    %6 = vector.multi_reduction <add>, %5, %cst_3 [1] : vector<1x4x2x128xf32> to vector<1x2x128xf32>
    %7 = vector.shape_cast %6 : vector<1x2x128xf32> to vector<1x1x2x128xf32>
    %8 = tpu.reciprocal %7 : vector<1x1x2x128xf32> -> vector<1x1x2x128xf32>
    %9 = vector.broadcast %8 : vector<1x1x2x128xf32> to vector<1x4x2x128xf32>
    %10 = arith.mulf %5, %9 : vector<1x4x2x128xf32>
    %c0_4 = arith.constant 0 : index
    %c0_5 = arith.constant 0 : index
    %c0_6 = arith.constant 0 : index
    %c0_7 = arith.constant 0 : index
    %11 = vector.load %arg3[%c0_4, %c0_5, %c0_6, %c0_7] : memref<1x4x2x128xf32, #tpu.memory_space<vmem>>, vector<1x4x2x128xf32>
    tpu.vector_store %arg3[%c0_4, %c0_5, %c0_6, %c0_7], %10 {strides = array<i32>} : memref<1x4x2x128xf32, #tpu.memory_space<vmem>>, vector<1x4x2x128xf32>,
    return
  }
  func.func @transform_0(%arg0: i32, %arg1: i32) -> (i32, i32, i32, i32) {
    %c0_i32 = arith.constant 0 : i32
    %c0_i32_0 = arith.constant 0 : i32
    %c0_i32_1 = arith.constant 0 : i32
    return %arg0, %c0_i32, %arg1, %c0_i32_0 : i32, i32, i32, i32
  }
  func.func @transform_1(%arg0: i32, %arg1: i32) -> (i32, i32, i32, i32) {
    %c0_i32 = arith.constant 0 : i32
    %c0_i32_0 = arith.constant 0 : i32
    %c0_i32_1 = arith.constant 0 : i32
    return %arg0, %c0_i32, %arg1, %c0_i32_0 : i32, i32, i32, i32
  }
}

</mosaic_0001>

<llo_original>
// kernel: tpu_custom_call.1
$region0: #{tpu_custom_call.1}
  #allocation0 [shape = 'u32[]', space=smem, size = 0x4, offset = 0x4, fixed_abs, tag = 'smem constant byte address 0x4 - core index']
  #allocation1 [shape = 'u32[144,128]{1,0:T(1,128)}', space=vmem, size = 0x12000, scoped, tag = 'internal scratch']
  %s0 = inlined_call_operand.hbm [shape: f32[2,4,2,128], index: 0, kind: input, shape index: {}]
  %s1 = inlined_call_operand.hbm [shape: f32[2,4,2,128], index: 1, kind: output, shape index: {}]
  %s2 = sld [smem:[#allocation0]]
  $region41: #{tpu_custom_call.1} parent=0
    _
  %s4 = ssub.s32 1, %s2
  %s5 = scalar_select 0, %s4, %s2
  $region1: #{tpu_custom_call.1} parent=0
    #allocation2 [shape = 'u8[8192]{0}', space=vmem, size = 0x2000, scoped, tag = 'input window, operand 0']
    #allocation3 [shape = 's32[2]{0}', space=sflag, size = 0x8, scoped, tag = 'scoped memory for tpu_custom_call.1']
    #allocation4 [shape = 's32[2]{0}', space=sflag, size = 0x8, scoped, tag = 'scoped memory for tpu_custom_call.1']
    #allocation5 [shape = 'u8[8192]{0}', space=vmem, size = 0x2000, scoped, tag = 'output window, operand 0']
    %6 = vsyncpa [#allocation3], 0
    %s7 = scalar_lea.sflag [#allocation3], 1
    %8 = vsyncpa %s7, 0
    %9 = vsyncpa [#allocation4], 0
    %s10 = scalar_lea.sflag [#allocation4], 1
    %11 = vsyncpa %s10, 0
    loop: start=0, step=1, limit=4
    $region2: #{tpu_custom_call.1} parent=1 // loop_pre_header
      _
    $region3: #{tpu_custom_call.1} parent=1 // loop_header
      %s13 = sphi 0, %s17
      %p14 = scmp.ge.s32.totalorder %s13, 4
      %s20 = sphi 0, %s32
      %s21 = sphi 0, %s28
      %s22 = sphi 0, %s20
      %s23 = sphi 0, %s21
      %s24 = sphi 0, %s22
      %s25 = sphi 0, %s23
      %s37 = sphi 0, %s39
      %s40 = sphi 0, %s37
      %s41 = sphi 0, %s40
      %s57 = sphi 0, %s41
      %s65 = sphi 0, %s67
      %s68 = sphi 0, %s65
      %s69 = sphi 0, %s68
      %s85 = sphi 0, %s69
    $region4: #{tpu_custom_call.1} parent=1 // loop_header_branch
      %16 = sbr.rel (%p14) target = $region8
    $region5: #{tpu_custom_call.1} parent=1 // loop_body
      %s18 = ssub.s32 %s13, 1
      %s19 = ssub.s32 %s13, 2
      %s26 = sadd.s32 1, %s21
      %p27 = scmp.ge.s32.totalorder %s26, 1
      %s28 = scalar_select %p27, 0, %s26
      %s29 = sadd.s32 1, %s20
      %s30 = scalar_select %p27, %s29, %s20
      %p31 = scmp.ge.s32.totalorder %s30, 2
      %s32 = scalar_select %p31, 0, %s30
      %s33 = ssub.s32 %s20, %s32
      %s34 = ssub.s32 %s21, %s28
      %s35 = sor.u32 %s33, %s34
      %p36 = scmp.eq.s32.totalorder %s35, 0
      %s38 = sadd.s32 %s37, 1
      %s39 = scalar_select %p36, %s37, %s38
      %p42 = pneg %p36
      %p43 = scmp.eq.s32.totalorder %s13, 1
      %p44 = por %p42, %p43
      %p45 = scmp.ne.s32.totalorder %s37, %s40
      %p46 = scmp.eq.s32.totalorder %s13, 0
      %p47 = por %p45, %p46
      %p48 = scmp.ne.s32.totalorder %s37, %s40
      %p49 = scmp.eq.s32.totalorder %s18, 1
      %p50 = por %p48, %p49
      %p51 = scmp.ne.s32.totalorder %s40, %s41
      %p52 = scmp.eq.s32.totalorder %s18, 0
      %p53 = por %p51, %p52
      %p54 = scmp.ne.s32.totalorder %s40, %s41
      %p55 = scmp.eq.s32.totalorder %s19, 1
      %p56 = por %p54, %p55
      %p58 = scmp.ne.s32.totalorder %s41, %s57
      %p59 = scmp.eq.s32.totalorder %s19, 0
      %p60 = por %p58, %p59
      %s61 = ssub.s32 %s20, %s32
      %s62 = ssub.s32 %s21, %s28
      %s63 = sor.u32 %s61, %s62
      %p64 = scmp.eq.s32.totalorder %s63, 0
      %s66 = sadd.s32 %s65, 1
      %s67 = scalar_select %p64, %s65, %s66
      %p70 = pneg %p64
      %p71 = scmp.eq.s32.totalorder %s13, 1
      %p72 = por %p70, %p71
      %p73 = scmp.ne.s32.totalorder %s65, %s68
      %p74 = scmp.eq.s32.totalorder %s13, 0
      %p75 = por %p73, %p74
      %p76 = scmp.ne.s32.totalorder %s65, %s68
      %p77 = scmp.eq.s32.totalorder %s18, 1
      %p78 = por %p76, %p77
      %p79 = scmp.ne.s32.totalorder %s68, %s69
      %p80 = scmp.eq.s32.totalorder %s18, 0
      %p81 = por %p79, %p80
      %p82 = scmp.ne.s32.totalorder %s68, %s69
      %p83 = scmp.eq.s32.totalorder %s19, 1
      %p84 = por %p82, %p83
      %p86 = scmp.ne.s32.totalorder %s69, %s85
      %p87 = scmp.eq.s32.totalorder %s19, 0
      %p88 = por %p86, %p87
      %p89 = scmp.le.s32.totalorder 1, %s13
      %p90 = scmp.lt.s32.totalorder %s13, 3
      %p91 = pnand %p89, %p90
      %p92 = pneg %p91
      // Predicated region
      $region9: #{tpu_custom_call.1} parent=5 // pred_check
        _
      $region10: #{tpu_custom_call.1} parent=5 // pred_check_branch
        %94 = sbr.rel (%p91) target = $region12
      $region11: #{tpu_custom_call.1} parent=5 // pred_region
        %s95 = ssub.s32 %s13, 1
      $region12: #{tpu_custom_call.1} parent=5 // pred_fallthru
        _
      %p96 = scmp.lt.s32.totalorder %s13, 2
      // Predicated region
      $region13: #{tpu_custom_call.1} parent=5 // pred_check
        %p97 = pneg %p96
      $region14: #{tpu_custom_call.1} parent=5 // pred_check_branch
        %99 = sbr.rel (%p97) target = $region16
      $region15: #{tpu_custom_call.1} parent=5 // pred_region
        // Predicated region
        $region17: #{tpu_custom_call.1} parent=15 // pred_check
          %p100 = pneg %p47
        $region18: #{tpu_custom_call.1} parent=15 // pred_check_branch
          %102 = sbr.rel (%p100) target = $region20
        $region19: #{tpu_custom_call.1} parent=15 // pred_region
          %s103 = sand.u32 %s37, 1
          %s104 = scalar_lea.sflag [#allocation3], %s103
          %s105 = sand.u32 %s37, 1
          %s106 = smul.addr %s105, 8
          %s107 = scalar_lea.vmem [#allocation2], %s106
          %s109 = ssub.s32 128, 128
          %110 = vsyncadd %s104, %s109
          %s111 = smul.addr %s20, 4
          %s112 = sadd.s32 %s21, %s111
          %s113 = smul.addr %s112, 32
          %s114 = scalar_lea.hbm %s0, %s113
          %s115 = sshll.u32 %s107, 4
          %s116 = int_to_ptr.vmem [resolvable:$true] %s115
          %121 = dma.hbm_to_vmem [thread:$0]  %s114, 128, %s116, %s104, 32, 32, 2
        $region20: #{tpu_custom_call.1} parent=15 // pred_fallthru
          _
      $region16: #{tpu_custom_call.1} parent=5 // pred_fallthru
        _
      %p122 = scmp.le.s32.totalorder 1, %s13
      %p123 = scmp.lt.s32.totalorder %s13, 3
      %p124 = pnand %p122, %p123
      %p125 = pneg %p124
      // Predicated region
      $region21: #{tpu_custom_call.1} parent=5 // pred_check
        _
      $region22: #{tpu_custom_call.1} parent=5 // pred_check_branch
        %127 = sbr.rel (%p124) target = $region24
      $region23: #{tpu_custom_call.1} parent=5 // pred_region
        %s128 = ssub.s32 %s13, 1
        %s129 = sand.u32 %s40, 1
        %s130 = scalar_lea.sflag [#allocation3], %s129
        %s131 = sand.u32 %s40, 1
        %s132 = smul.addr %s131, 8
        %s133 = scalar_lea.vmem [#allocation2], %s132
        // Predicated region
        $region25: #{tpu_custom_call.1} parent=23 // pred_check
          %p134 = pneg %p53
        $region26: #{tpu_custom_call.1} parent=23 // pred_check_branch
          %136 = sbr.rel (%p134) target = $region28
        $region27: #{tpu_custom_call.1} parent=23 // pred_region
          %137 = dma.done %s130, 128
        $region28: #{tpu_custom_call.1} parent=23 // pred_fallthru
          _
        %s138 = sand.u32 %s40, 1
        %s139 = scalar_lea.sflag [#allocation3], %s138
        %s140 = sand.u32 %s40, 1
        %s141 = smul.addr %s140, 8
        %s142 = scalar_lea.vmem [#allocation2], %s141
        %p143 = pneg %p53
        %p144 = pneg %p50
        %p145 = pneg %p81
        %p146 = pneg %p78
        %s147 = sand.u32 %s68, 1
        %s148 = scalar_lea.sflag [#allocation4], %s147
        %s149 = sand.u32 %s68, 1
        %s150 = smul.addr %s149, 8
        %s151 = scalar_lea.vmem [#allocation5], %s150
        %v152 = vld [vmem:[%s133] sm:$0x3]
        %v153 = vld [vmem:[%s133 + $0x2] sm:$0x3]
        %v154 = vld [vmem:[%s133 + $0x4] sm:$0x3]
        %v155 = vld [vmem:[%s133 + $0x6] sm:$0x3]
        %vm156 = vcmask 1041408
        %v157 = vsel %vm156, %v152, -inf
        %v158 = vsel %vm156, %v153, -inf
        %v159 = vsel %vm156, %v154, -inf
        %v160 = vsel %vm156, %v155, -inf
        %v161 = vmax.f32 %v157, %v158
        %v162 = vmax.f32 %v159, %v160
        %v163 = vmax.f32 %v161, %v162
        %v164 = vsub.f32 %v152, %v163
        %v165 = vsub.f32 %v153, %v163
        %v166 = vsub.f32 %v154, %v163
        %v167 = vsub.f32 %v155, %v163
        %v168 = vmul.f32 %v164, 1.442695
        %v169 = vpow.pop %v168
        %v170 = vmul.f32 %v165, 1.442695
        %v171 = vpow.pop %v170
        %v172 = vmul.f32 %v166, 1.442695
        %v173 = vpow.pop %v172
        %v174 = vmul.f32 %v167, 1.442695
        %v175 = vpow.pop %v174
        %v176 = vsel %vm156, %v169, 0.0
        %v177 = vsel %vm156, %v171, 0.0
        %v178 = vadd.f32 %v176, %v177
        %v179 = vsel %vm156, %v173, 0.0
        %v180 = vadd.f32 %v178, %v179
        %v181 = vsel %vm156, %v175, 0.0
        %v182 = vadd.f32 %v180, %v181
        %v183 = vrcp.pop %v182
        %v184 = vmul.f32 %v169, %v183
        %v185 = vmul.f32 %v171, %v183
        %v186 = vmul.f32 %v173, %v183
        %v187 = vmul.f32 %v175, %v183
        %188 = vst [vmem:[%s151] sm:$0x3] %v184
        %189 = vst [vmem:[%s151 + $0x2] sm:$0x3] %v185
        %190 = vst [vmem:[%s151 + $0x4] sm:$0x3] %v186
        %191 = vst [vmem:[%s151 + $0x6] sm:$0x3] %v187
        %s192 = sand.u32 %s68, 1
        %s193 = scalar_lea.sflag [#allocation4], %s192
        %s194 = sand.u32 %s68, 1
        %s195 = smul.addr %s194, 8
        %s196 = scalar_lea.vmem [#allocation5], %s195
        // Predicated region
        $region29: #{tpu_custom_call.1} parent=23 // pred_check
          %p197 = pneg %p78
        $region30: #{tpu_custom_call.1} parent=23 // pred_check_branch
          %199 = sbr.rel (%p197) target = $region32
        $region31: #{tpu_custom_call.1} parent=23 // pred_region
          %s201 = ssub.s32 128, 128
          %202 = vsyncadd %s193, %s201
          %s203 = smul.addr %s22, 4
          %s204 = sadd.s32 %s23, %s203
          %s205 = smul.addr %s204, 32
          %s206 = scalar_lea.hbm %s1, %s205
          %s207 = sshll.u32 %s196, 4
          %s208 = int_to_ptr.vmem [resolvable:$true] %s207
          %213 = dma.vmem_to_hbm [thread:$0]  %s208, 128, %s206, %s193, 32, 32, 2
        $region32: #{tpu_custom_call.1} parent=23 // pred_fallthru
          _
      $region24: #{tpu_custom_call.1} parent=5 // pred_fallthru
        _
      %p214 = scmp.le.s32.totalorder 2, %s13
      // Predicated region
      $region33: #{tpu_custom_call.1} parent=5 // pred_check
        %p215 = pneg %p214
      $region34: #{tpu_custom_call.1} parent=5 // pred_check_branch
        %217 = sbr.rel (%p215) target = $region36
      $region35: #{tpu_custom_call.1} parent=5 // pred_region
        %s218 = ssub.s32 %s13, 2
        // Predicated region
        $region37: #{tpu_custom_call.1} parent=35 // pred_check
          %p219 = pneg %p84
        $region38: #{tpu_custom_call.1} parent=35 // pred_check_branch
          %221 = sbr.rel (%p219) target = $region40
        $region39: #{tpu_custom_call.1} parent=35 // pred_region
          %s222 = sand.u32 %s69, 1
          %s223 = scalar_lea.sflag [#allocation4], %s222
          %s224 = sand.u32 %s69, 1
          %s225 = smul.addr %s224, 8
          %s226 = scalar_lea.vmem [#allocation5], %s225
          %227 = dma.done %s223, 128
        $region40: #{tpu_custom_call.1} parent=35 // pred_fallthru
          _
      $region36: #{tpu_custom_call.1} parent=5 // pred_fallthru
        _
    $region6: #{tpu_custom_call.1} parent=1 // loop_footer
      %s17 = sadd.s32 1, %s13
    $region7: #{tpu_custom_call.1} parent=1 // loop_footer_branch
      %12 = sbr.rel target = $region3
    $region8: #{tpu_custom_call.1} parent=1 // loop_exit
      _
    %228 = vsyncpa [#allocation3], 1
    %s229 = scalar_lea.sflag [#allocation3], 1
    %230 = vsyncpa %s229, 1
    %231 = vsyncpa [#allocation4], 1
    %s232 = scalar_lea.sflag [#allocation4], 1
    %233 = vsyncpa %s232, 1

</llo_original>
